<compile_context>
chip_gen: v7x
topology: tpu7x:2x2x1
jax: 0.10.0
libtpu: 0.0.40
codegen_flags: <defaults>
</compile_context>

<pallas_src>
import jax
import jax.numpy as jnp
from jax.experimental import pallas as pl
from jax.experimental.pallas import tpu as pltpu


# ----------------------------------------------------------------------------
# In-script replication of modelforge.potential.utils.atomic_group_dict /
# atomic_period_dict for Z = 1..18 (deterministic, no file I/O).
# ----------------------------------------------------------------------------
ATOMIC_GROUP = {
    1: 1, 2: 18,
    3: 1, 4: 2, 5: 13, 6: 14, 7: 15, 8: 16, 9: 17, 10: 18,
    11: 1, 12: 2, 13: 13, 14: 14, 15: 15, 16: 16, 17: 17, 18: 18,
}
ATOMIC_PERIOD = {
    1: 1, 2: 1,
    3: 2, 4: 2, 5: 2, 6: 2, 7: 2, 8: 2, 9: 2, 10: 2,
    11: 3, 12: 3, 13: 3, 14: 3, 15: 3, 16: 3, 17: 3, 18: 3,
}
MAX_Z = 18


def build_lookup_table(key: str) -> jnp.ndarray:
    """Dense int32 lookup: Z -> group/period index (index 0 unused)."""
    d = ATOMIC_GROUP if key == "atomic_groups" else ATOMIC_PERIOD
    tab = [0] * (MAX_Z + 1)
    for z, v in d.items():
        tab[z] = v
    return jnp.asarray(tab, dtype=jnp.int32)


def _round_up(x: int, m: int) -> int:
    return ((x + m - 1) // m) * m


def _choose_block_n(N: int, max_block: int = 4096) -> int:
    """Rows per grid step.

    Big enough to amortize the ~0.35us per-grid-step cost (up to 4096 rows),
    small enough that large N still yields >=8 grid steps (megacore sharding
    on v7x), and never larger than the sublane-rounded atom count.
    """
    bn = _round_up(pl.cdiv(N, 8), 128)     # aim for >= 8 steps when N is large
    bn = max(128, min(max_block, bn))       # amortize overhead / cap VMEM
    bn = min(bn, _round_up(N, 8))           # don't exceed the (rounded) array
    return max(8, bn)


# ----------------------------------------------------------------------------
# Pallas kernel: fused embedding gather (one-hot matmul) + concat.
# ----------------------------------------------------------------------------
def _make_kernel(F: int, E: int, num_rows: int):
    def kernel(prop_ref, idx_ref, table_ref, out_ref):
        # prop_ref : (block_n, F)      float32   per-atom properties
        # idx_ref  : (block_n, 1)      int32     atomic numbers (0..MAX_Z)
        # table_ref: (num_rows, E)     float32   fused Z -> embedding table
        # out_ref  : (block_n, F + E)  float32
        bn = out_ref.shape[0]

        idx = idx_ref[...]                                            # (bn, 1)
        row_iota = jax.lax.broadcasted_iota(jnp.int32, (bn, num_rows), 1)
        # One-hot over the fused table rows; out-of-range atomic numbers give
        # an all-zero row -> zero embedding (nn.Embedding would raise instead).
        one_hot = (idx == row_iota).astype(table_ref.dtype)           # (bn, num_rows)
        # MXU gather.  precision=HIGHEST keeps the f32 weights exact on
        # bf16-MXU generations (multi-pass); the MXU has huge slack here.
        gathered = jnp.dot(one_hot, table_ref[...],
                           precision=jax.lax.Precision.HIGHEST,
                           preferred_element_type=jnp.float32)        # (bn, E)

        # Direct slice stores -- no in-vreg concat / lane shuffle; both stores
        # are in-VMEM, the HBM writeback of the block is a single dense DMA.
        out_ref[:, pl.ds(0, F)] = prop_ref[...]
        out_ref[:, pl.ds(F, E)] = gathered.astype(out_ref.dtype)

    return kernel


def group_period_embedding(per_atom_property: jnp.ndarray,
                           atomic_numbers: jnp.ndarray,
                           embedding_weight: jnp.ndarray,
                           key: str = "atomic_groups",
                           max_block_n: int = 4096) -> jnp.ndarray:
    """JAX wrapper reproducing GroupPeriodEmbedding.forward."""
    N, F = per_atom_property.shape
    num_emb, E = embedding_weight.shape
    out_w = F + E

    # Fold the Z -> group/period dict lookup into the embedding table once
    # (a (MAX_Z+1) x E gather, independent of N).  The kernel then one-hots
    # atomic numbers directly against this fused table.
    lut = jnp.clip(build_lookup_table(key), 0, num_emb - 1)            # (MAX_Z+1,)
    fused_table = jnp.take(embedding_weight, lut, axis=0)              # (MAX_Z+1, E)
    num_rows = MAX_Z + 1

    # TODO(synk): nn.Embedding raises on out-of-range indices; here atomic
    # numbers outside [0, MAX_Z] silently produce a zero embedding row.
    idx = atomic_numbers.astype(jnp.int32).reshape(N, 1)

    block_n = _choose_block_n(N, max_block_n)
    grid = (pl.cdiv(N, block_n),)                 # ragged last block handled by Pallas

    kernel = _make_kernel(F, E, num_rows)
    out = pl.pallas_call(
        kernel,
        out_shape=jax.ShapeDtypeStruct((N, out_w), per_atom_property.dtype),
        grid_spec=pltpu.PrefetchScalarGridSpec(
            num_scalar_prefetch=0,
            grid=grid,
            in_specs=[
                pl.BlockSpec((block_n, F), lambda i: (i, 0)),
                pl.BlockSpec((block_n, 1), lambda i: (i, 0)),
                # Full fused table resident; constant index_map => DMA'd once.
                pl.BlockSpec((num_rows, E), lambda i: (0, 0)),
            ],
            # Lane dim == full array width (F+E): legal BlockSpec, no padding,
            # no trailing slice pass in the wrapper.
            out_specs=pl.BlockSpec((block_n, out_w), lambda i: (i, 0)),
        ),
        compiler_params=pltpu.CompilerParams(
            dimension_semantics=("parallel",)),
    )(per_atom_property, idx, fused_table)

    return out


if __name__ == "__main__":
    key0 = jax.random.PRNGKey(0)
    k1, k2, k3 = jax.random.split(key0, 3)

    # Small, module-consistent shapes.
    F = 16            # per-atom property / feature width
    E = 32            # embedding dimension
    NUM_EMB = 19      # nn.Embedding rows (group indices 0..18)

    embedding_weight = jax.random.normal(k3, (NUM_EMB, E), dtype=jnp.float32)

    def reference(prop, z, weight, which):
        lut = build_lookup_table(which)
        value = jnp.take(lut, z.astype(jnp.int32))
        return jnp.concatenate([prop, weight[value]], axis=1)

    # Case 1: tiny (N=8, single block).
    # Case 2: multi-block grid with a ragged tail block (N=777).
    for name, N in (("small", 8), ("multi_block_ragged_tail", 777)):
        ka, kb = jax.random.split(jax.random.fold_in(k1, N))
        prop = jax.random.normal(ka, (N, F), dtype=jnp.float32)
        z = jax.random.randint(kb, (N,), 1, MAX_Z + 1, dtype=jnp.int32)

        out = group_period_embedding(prop, z, embedding_weight,
                                     key="atomic_groups")
        out = jax.block_until_ready(out)
        ref = reference(prop, z, embedding_weight, "atomic_groups")
        assert out.shape == (N, F + E), (name, out.shape)
        assert jnp.allclose(out, ref, atol=1e-5), f"mismatch vs reference ({name})"

    # Also exercise the atomic_periods path once.
    prop = jax.random.normal(k1, (8, F), dtype=jnp.float32)
    z = jax.random.randint(k2, (8,), 1, MAX_Z + 1, dtype=jnp.int32)
    out = jax.block_until_ready(
        group_period_embedding(prop, z, embedding_weight, key="atomic_periods"))
    ref = reference(prop, z, embedding_weight, "atomic_periods")
    assert jnp.allclose(out, ref, atol=1e-5), "mismatch vs reference (periods)"

    print("KERNEL_OK")
</pallas_src>

<mosaic_0001>
module attributes {stable_mosaic.version = 11 : i64} {
  func.func @kernel(%arg0: i32, %arg1: memref<8x16xf32, #tpu.memory_space<vmem>>, %arg2: memref<8x1xi32, #tpu.memory_space<vmem>>, %arg3: memref<19x32xf32, #tpu.memory_space<vmem>>, %arg4: memref<8x48xf32, #tpu.memory_space<vmem>>) attributes {dimension_semantics = [#tpu.dimension_semantics<parallel>], iteration_bounds = array<i64: 1>, scalar_prefetch = 0 : i64, scratch_operands = 0 : i64, tpu.core_type = #tpu.core_type<tc>, window_params = [{transform_indices = @transform_0, window_bounds = array<i64: 8, 16>}, {transform_indices = @transform_1, window_bounds = array<i64: 8, 1>}, {pipeline_mode = #tpu.pipeline_mode<synchronous>, transform_indices = @transform_2, window_bounds = array<i64: 19, 32>}, {transform_indices = @transform_3, window_bounds = array<i64: 8, 48>}]} {
    %c0 = arith.constant 0 : index
    %c0_0 = arith.constant 0 : index
    %0 = vector.load %arg2[%c0, %c0_0] : memref<8x1xi32, #tpu.memory_space<vmem>>, vector<8x1xi32>
    %1 = tpu.iota {dimensions = array<i32: 1>} : vector<8x19xi32>
    %2 = vector.broadcast %0 : vector<8x1xi32> to vector<8x19xi32>
    %3 = arith.cmpi eq, %2, %1 : vector<8x19xi32>
    %4 = arith.extui %3 : vector<8x19xi1> to vector<8x19xi32>
    %5 = arith.sitofp %4 : vector<8x19xi32> to vector<8x19xf32>
    %c0_1 = arith.constant 0 : index
    %c0_2 = arith.constant 0 : index
    %6 = vector.load %arg3[%c0_1, %c0_2] : memref<19x32xf32, #tpu.memory_space<vmem>>, vector<19x32xf32>
    %cst = arith.constant dense<0.000000e+00> : vector<8x32xf32>
    %7 = tpu.matmul %5, %6, %cst {dimension_numbers = #tpu.dot_dimension_numbers<[1], [0], [0], [1], [0, 0, 1, 1], [], []>, precision = #tpu.contract_precision<fp32>} : vector<8x19xf32>, vector<19x32xf32>, vector<8x32xf32> -> vector<8x32xf32>
    %c0_3 = arith.constant 0 : index
    %c0_4 = arith.constant 0 : index
    %8 = vector.load %arg1[%c0_3, %c0_4] : memref<8x16xf32, #tpu.memory_space<vmem>>, vector<8x16xf32>
    %c0_5 = arith.constant 0 : index
    %c0_6 = arith.constant 0 : index
    %9 = vector.load %arg4[%c0_5, %c0_6] : memref<8x48xf32, #tpu.memory_space<vmem>>, vector<8x16xf32>
    tpu.vector_store %arg4[%c0_5, %c0_6], %8 {strides = array<i32>} : memref<8x48xf32, #tpu.memory_space<vmem>>, vector<8x16xf32>,
    %c0_7 = arith.constant 0 : index
    %c16 = arith.constant 16 : index
    %10 = vector.load %arg4[%c0_7, %c16] : memref<8x48xf32, #tpu.memory_space<vmem>>, vector<8x32xf32>
    tpu.vector_store %arg4[%c0_7, %c16], %7 {strides = array<i32>} : memref<8x48xf32, #tpu.memory_space<vmem>>, vector<8x32xf32>,
    return
  }
  func.func @transform_0(%arg0: i32) -> (i32, i32) {
    %c0_i32 = arith.constant 0 : i32
    %c0_i32_0 = arith.constant 0 : i32
    return %arg0, %c0_i32 : i32, i32
  }
  func.func @transform_1(%arg0: i32) -> (i32, i32) {
    %c0_i32 = arith.constant 0 : i32
    %c0_i32_0 = arith.constant 0 : i32
    return %arg0, %c0_i32 : i32, i32
  }
  func.func @transform_2(%arg0: i32) -> (i32, i32) {
    %c0_i32 = arith.constant 0 : i32
    %c0_i32_0 = arith.constant 0 : i32
    %c0_i32_1 = arith.constant 0 : i32
    return %c0_i32, %c0_i32_0 : i32, i32
  }
  func.func @transform_3(%arg0: i32) -> (i32, i32) {
    %c0_i32 = arith.constant 0 : i32
    %c0_i32_0 = arith.constant 0 : i32
    return %arg0, %c0_i32 : i32, i32
  }
}

</mosaic_0001>

<llo_original>
// kernel: tpu_custom_call.1
$region0: #{tpu_custom_call.1}
  #allocation0 [shape = 'u32[]', space=smem, size = 0x4, offset = 0x4, fixed_abs, tag = 'smem constant byte address 0x4 - core index']
  #allocation1 [shape = 'u32[144,128]{1,0:T(1,128)}', space=vmem, size = 0x12000, scoped, tag = 'internal scratch']
  %s0 = inlined_call_operand.vmem [shape: f32[8,16], index: 0, kind: input, shape index: {}]
  %s1 = inlined_call_operand.vmem [shape: s32[8,1], index: 1, kind: input, shape index: {}]
  %s2 = inlined_call_operand.hbm [shape: f32[19,32], index: 2, kind: input, shape index: {}]
  %s3 = inlined_call_operand.hbm [shape: f32[8,48], index: 3, kind: output, shape index: {}]
  %s4 = sld [smem:[#allocation0]]
  $region26: #{tpu_custom_call.1} parent=0
    _
  %s6 = ssub.s32 1, %s4
  %s7 = scalar_select 0, %s6, %s4
  $region1: #{tpu_custom_call.1} parent=0
    #allocation2 [shape = 'u8[12288]{0}', space=vmem, size = 0x3000, scoped, tag = 'input window, operand 2, single buffered']
    #allocation3 [shape = 's32[1]{0}', space=sflag, size = 0x4, scoped, tag = 'scoped memory for tpu_custom_call.1']
    #allocation4 [shape = 's32[1]{0}', space=sflag, size = 0x4, scoped, tag = 'scoped memory for tpu_custom_call.1']
    #allocation5 [shape = 'u8[4096]{0}', space=vmem, size = 0x1000, scoped, tag = 'output window, operand 0, single buffered']
    %8 = vsyncpa [#allocation3], 0
    %9 = vsyncpa [#allocation4], 0
    // Predicated region
    $region2: #{tpu_custom_call.1} parent=1 // pred_check
      _
    $region3: #{tpu_custom_call.1} parent=1 // pred_check_branch
      %11 = sbr.rel (0) target = $region5
    $region4: #{tpu_custom_call.1} parent=1 // pred_region
      _
    $region5: #{tpu_custom_call.1} parent=1 // pred_fallthru
      _
    // Predicated region
    $region6: #{tpu_custom_call.1} parent=1 // pred_check
      _
    $region7: #{tpu_custom_call.1} parent=1 // pred_check_branch
      %13 = sbr.rel (0) target = $region9
    $region8: #{tpu_custom_call.1} parent=1 // pred_region
      _
    $region9: #{tpu_custom_call.1} parent=1 // pred_fallthru
      _
    // Predicated region
    $region10: #{tpu_custom_call.1} parent=1 // pred_check
      _
    $region11: #{tpu_custom_call.1} parent=1 // pred_check_branch
      %15 = sbr.rel (0) target = $region13
    $region12: #{tpu_custom_call.1} parent=1 // pred_region
      %s17 = ssub.s32 384, 384
      %18 = vsyncadd [#allocation3], %s17
      %s19 = sshll.u32 [#allocation2], 4
      %s20 = int_to_ptr.vmem [resolvable:$true] %s19
      %25 = dma.hbm_to_vmem [thread:$0]  %s2, 384, %s20, [#allocation3], 128, 128, 8
    $region13: #{tpu_custom_call.1} parent=1 // pred_fallthru
      _
    // Predicated region
    $region14: #{tpu_custom_call.1} parent=1 // pred_check
      _
    $region15: #{tpu_custom_call.1} parent=1 // pred_check_branch
      %27 = sbr.rel (0) target = $region17
    $region16: #{tpu_custom_call.1} parent=1 // pred_region
      %28 = dma.done [#allocation3], 384
    $region17: #{tpu_custom_call.1} parent=1 // pred_fallthru
      _
    %v29 = vld [vmem:[%s1] sm:$0xff]
    %v30 = vlaneseq
    %v31 = vand.u32 %v30, 127
    %32 = vset.pattern.permute.xlu0 0
    %33 = vperm.xlu0 %32, %v29
    %v34 = vpop.permute.xlu0 %33
    %vm35 = vcmp.eq.s32.totalorder %v34, %v31
    %v36 = vsel %vm35, 1, 0
    %v37 = vcvt.s32.f32 %v36
    %v38 = vld [vmem:[#allocation2] sm:$0xff]
    %v39 = vld [vmem:[#allocation2 + $0x8] sm:$0xff]
    %v40 = vld [vmem:[#allocation2 + $0x10] sm:$0x7]
    %vm41 = vcmask 154624
    %v43 = vsel %vm41, %v37, 0
    %vm45 = vcmask 1042432
    %v47 = vsel %vm45, %v40, 0
    %49 = vmatprep.subr.mxu0 0.0
    %v50 = vand.u32 %v38, 4294901760
    %51 = vmatpush1.msra.mxu0 %v50
    %52 = vmatprep.subr.mxu0 0.0
    %v53 = vand.u32 %v39, 4294901760
    %54 = vmatpush1.msra.mxu0 %v53
    %55 = vmatprep.subr.mxu0 0.0
    %v56 = vand.u32 %v47, 4294901760
    %57 = vmatpush1.msra.mxu0 %v56
    %58 = vmatprep.subr.mxu0 0.0
    %59 = vmatpush1.msra.mxu0 0.0
    %60 = vmatprep.subr.mxu0 0.0
    %61 = vmatpush1.msra.mxu0 0.0
    %62 = vmatprep.subr.mxu0 0.0
    %63 = vmatpush1.msra.mxu0 0.0
    %64 = vmatprep.subr.mxu0 0.0
    %65 = vmatpush1.msra.mxu0 0.0
    %66 = vmatprep.subr.mxu0 0.0
    %67 = vmatpush1.msra.mxu0 0.0
    %68 = vmatprep.subr.mxu0 0.0
    %69 = vmatpush1.msra.mxu0 0.0
    %70 = vmatprep.subr.mxu0 0.0
    %71 = vmatpush1.msra.mxu0 0.0
    %72 = vmatprep.subr.mxu0 0.0
    %73 = vmatpush1.msra.mxu0 0.0
    %74 = vmatprep.subr.mxu0 0.0
    %75 = vmatpush1.msra.mxu0 0.0
    %76 = vmatprep.subr.mxu0 0.0
    %77 = vmatpush1.msra.mxu0 0.0
    %78 = vmatprep.subr.mxu0 0.0
    %79 = vmatpush1.msra.mxu0 0.0
    %80 = vmatprep.subr.mxu0 0.0
    %81 = vmatpush1.msra.mxu0 0.0
    %82 = vmatprep.subr.mxu0 0.0
    %83 = vmatpush1.msra.mxu0 0.0
    %84 = vmatprep.subr.mxu0 0.0
    %85 = vmatpush1.msra.mxu0 0.0
    %86 = vmatprep.subr.mxu0 0.0
    %87 = vmatpush1.msra.mxu0 0.0
    %88 = vmatprep.subr.mxu0 0.0
    %89 = vmatpush1.msra.mxu0 0.0
    %90 = vmatprep.subr.mxu0 0.0
    %91 = vmatpush1.msra.mxu0 0.0
    %92 = vmatprep.subr.mxu0 0.0
    %93 = vmatpush1.msra.mxu0 0.0
    %94 = vmatprep.subr.mxu0 0.0
    %95 = vmatpush1.msra.mxu0 0.0
    %96 = vmatprep.subr.mxu0 0.0
    %97 = vmatpush1.msra.mxu0 0.0
    %98 = vmatprep.subr.mxu0 0.0
    %99 = vmatpush1.msra.mxu0 0.0
    %100 = vmatprep.subr.mxu0 0.0
    %101 = vmatpush1.msra.mxu0 0.0
    %102 = vmatprep.subr.mxu0 0.0
    %103 = vmatpush1.msra.mxu0 0.0
    %104 = vmatprep.subr.mxu0 0.0
    %105 = vmatpush1.msra.mxu0 0.0
    %106 = vmatprep.subr.mxu0 0.0
    %107 = vmatpush1.msra.mxu0 0.0
    %108 = vmatprep.subr.mxu0 0.0
    %109 = vmatpush1.msra.mxu0 0.0
    %110 = vmatprep.subr.mxu0 0.0
    %111 = vmatpush1.msra.mxu0 0.0
    %112 = vmatprep.subr.mxu0 0.0
    %113 = vmatpush1.msra.mxu0 0.0
    %114 = vmatprep.subr.mxu0 0.0
    %115 = vmatpush1.msra.mxu0 0.0
    %116 = vmatprep.mubr.f32.mxu0 0.0
    %v117 = vand.u32 %v43, 4294901760
    %v118 = vsub.f32 %v43, %v117
    %v119 = vand.u32 %v118, 4294901760
    %v120 = vsub.f32 %v118, %v119
    %v121 = vand.u32 %v120, 4294901760
    %122 = vmatmul.mubr.f32.gmra.mrb[0].mxu0 %v121
    %v123 = vpop.f32.mrb[0].mxu0
    %v124 = vadd.f32 0.0, %v123
    %v125 = vpop.f32.mrb[0].mxu0
    %126 = vdwg.mxu0
    %127 = vmatprep.subr.mxu0 0.0
    %v128 = vand.u32 %v38, 4294901760
    %v129 = vsub.f32 %v38, %v128
    %v130 = vand.u32 %v129, 4294901760
    %v131 = vsub.f32 %v129, %v130
    %v132 = vand.u32 %v131, 4294901760
    %133 = vmatpush1.msra.mxu0 %v132
    %134 = vmatprep.subr.mxu0 0.0
    %v135 = vand.u32 %v39, 4294901760
    %v136 = vsub.f32 %v39, %v135
    %v137 = vand.u32 %v136, 4294901760
    %v138 = vsub.f32 %v136, %v137
    %v139 = vand.u32 %v138, 4294901760
    %140 = vmatpush1.msra.mxu0 %v139
    %141 = vmatprep.subr.mxu0 0.0
    %v142 = vand.u32 %v47, 4294901760
    %v143 = vsub.f32 %v47, %v142
    %v144 = vand.u32 %v143, 4294901760
    %v145 = vsub.f32 %v143, %v144
    %v146 = vand.u32 %v145, 4294901760
    %147 = vmatpush1.msra.mxu0 %v146
    %148 = vmatprep.subr.mxu0 0.0
    %149 = vmatpush1.msra.mxu0 0.0
    %150 = vmatprep.subr.mxu0 0.0
    %151 = vmatpush1.msra.mxu0 0.0
    %152 = vmatprep.subr.mxu0 0.0
    %153 = vmatpush1.msra.mxu0 0.0
    %154 = vmatprep.subr.mxu0 0.0
    %155 = vmatpush1.msra.mxu0 0.0
    %156 = vmatprep.subr.mxu0 0.0
    %157 = vmatpush1.msra.mxu0 0.0
    %158 = vmatprep.subr.mxu0 0.0
    %159 = vmatpush1.msra.mxu0 0.0
    %160 = vmatprep.subr.mxu0 0.0
    %161 = vmatpush1.msra.mxu0 0.0
    %162 = vmatprep.subr.mxu0 0.0
    %163 = vmatpush1.msra.mxu0 0.0
    %164 = vmatprep.subr.mxu0 0.0
    %165 = vmatpush1.msra.mxu0 0.0
    %166 = vmatprep.subr.mxu0 0.0
    %167 = vmatpush1.msra.mxu0 0.0
    %168 = vmatprep.subr.mxu0 0.0
    %169 = vmatpush1.msra.mxu0 0.0
    %170 = vmatprep.subr.mxu0 0.0
    %171 = vmatpush1.msra.mxu0 0.0
    %172 = vmatprep.subr.mxu0 0.0
    %173 = vmatpush1.msra.mxu0 0.0
    %174 = vmatprep.subr.mxu0 0.0
    %175 = vmatpush1.msra.mxu0 0.0
    %176 = vmatprep.subr.mxu0 0.0
    %177 = vmatpush1.msra.mxu0 0.0
    %178 = vmatprep.subr.mxu0 0.0
    %179 = vmatpush1.msra.mxu0 0.0
    %180 = vmatprep.subr.mxu0 0.0
    %181 = vmatpush1.msra.mxu0 0.0
    %182 = vmatprep.subr.mxu0 0.0
    %183 = vmatpush1.msra.mxu0 0.0
    %184 = vmatprep.subr.mxu0 0.0
    %185 = vmatpush1.msra.mxu0 0.0
    %186 = vmatprep.subr.mxu0 0.0
    %187 = vmatpush1.msra.mxu0 0.0
    %188 = vmatprep.subr.mxu0 0.0
    %189 = vmatpush1.msra.mxu0 0.0
    %190 = vmatprep.subr.mxu0 0.0
    %191 = vmatpush1.msra.mxu0 0.0
    %192 = vmatprep.subr.mxu0 0.0
    %193 = vmatpush1.msra.mxu0 0.0
    %194 = vmatprep.subr.mxu0 0.0
    %195 = vmatpush1.msra.mxu0 0.0
    %196 = vmatprep.subr.mxu0 0.0
    %197 = vmatpush1.msra.mxu0 0.0
    %198 = vmatprep.subr.mxu0 0.0
    %199 = vmatpush1.msra.mxu0 0.0
    %200 = vmatprep.subr.mxu0 0.0
    %201 = vmatpush1.msra.mxu0 0.0
    %202 = vmatprep.subr.mxu0 0.0
    %203 = vmatpush1.msra.mxu0 0.0
    %204 = vmatprep.subr.mxu0 0.0
    %205 = vmatpush1.msra.mxu0 0.0
    %206 = vmatprep.mubr.f32.mxu0 0.0
    %v207 = vand.u32 %v43, 4294901760
    %208 = vmatmul.mubr.f32.gmra.mrb[0].mxu0 %v207
    %v209 = vpop.f32.mrb[0].mxu0
    %v210 = vadd.f32 %v124, %v209
    %v211 = vpop.f32.mrb[0].mxu0
    %212 = vdwg.mxu0
    %213 = vmatprep.subr.mxu0 0.0
    %v214 = vand.u32 %v38, 4294901760
    %v215 = vsub.f32 %v38, %v214
    %216 = vmatpush1.msra.mxu0 %v215
    %217 = vmatprep.subr.mxu0 0.0
    %v218 = vand.u32 %v39, 4294901760
    %v219 = vsub.f32 %v39, %v218
    %220 = vmatpush1.msra.mxu0 %v219
    %221 = vmatprep.subr.mxu0 0.0
    %v222 = vand.u32 %v47, 4294901760
    %v223 = vsub.f32 %v47, %v222
    %224 = vmatpush1.msra.mxu0 %v223
    %225 = vmatprep.subr.mxu0 0.0
    %226 = vmatpush1.msra.mxu0 0.0
    %227 = vmatprep.subr.mxu0 0.0
    %228 = vmatpush1.msra.mxu0 0.0
    %229 = vmatprep.subr.mxu0 0.0
    %230 = vmatpush1.msra.mxu0 0.0
    %231 = vmatprep.subr.mxu0 0.0
    %232 = vmatpush1.msra.mxu0 0.0
    %233 = vmatprep.subr.mxu0 0.0
    %234 = vmatpush1.msra.mxu0 0.0
    %235 = vmatprep.subr.mxu0 0.0
    %236 = vmatpush1.msra.mxu0 0.0
    %237 = vmatprep.subr.mxu0 0.0
    %238 = vmatpush1.msra.mxu0 0.0
    %239 = vmatprep.subr.mxu0 0.0
    %240 = vmatpush1.msra.mxu0 0.0
    %241 = vmatprep.subr.mxu0 0.0
    %242 = vmatpush1.msra.mxu0 0.0
    %243 = vmatprep.subr.mxu0 0.0
    %244 = vmatpush1.msra.mxu0 0.0
    %245 = vmatprep.subr.mxu0 0.0
    %246 = vmatpush1.msra.mxu0 0.0
    %247 = vmatprep.subr.mxu0 0.0
    %248 = vmatpush1.msra.mxu0 0.0
    %249 = vmatprep.subr.mxu0 0.0
    %250 = vmatpush1.msra.mxu0 0.0
    %251 = vmatprep.subr.mxu0 0.0
    %252 = vmatpush1.msra.mxu0 0.0
    %253 = vmatprep.subr.mxu0 0.0
    %254 = vmatpush1.msra.mxu0 0.0
    %255 = vmatprep.subr.mxu0 0.0
    %256 = vmatpush1.msra.mxu0 0.0
    %257 = vmatprep.subr.mxu0 0.0
    %258 = vmatpush1.msra.mxu0 0.0
    %259 = vmatprep.subr.mxu0 0.0
    %260 = vmatpush1.msra.mxu0 0.0
    %261 = vmatprep.subr.mxu0 0.0
    %262 = vmatpush1.msra.mxu0 0.0
    %263 = vmatprep.subr.mxu0 0.0
    %264 = vmatpush1.msra.mxu0 0.0
    %265 = vmatprep.subr.mxu0 0.0
    %266 = vmatpush1.msra.mxu0 0.0
    %267 = vmatprep.subr.mxu0 0.0
    %268 = vmatpush1.msra.mxu0 0.0
    %269 = vmatprep.subr.mxu0 0.0
    %270 = vmatpush1.msra.mxu0 0.0
    %271 = vmatprep.subr.mxu0 0.0
    %272 = vmatpush1.msra.mxu0 0.0
    %273 = vmatprep.subr.mxu0 0.0
    %274 = vmatpush1.msra.mxu0 0.0
    %275 = vmatprep.subr.mxu0 0.0
    %276 = vmatpush1.msra.mxu0 0.0
    %277 = vmatprep.subr.mxu0 0.0
    %278 = vmatpush1.msra.mxu0 0.0
    %279 = vmatprep.subr.mxu0 0.0
    %280 = vmatpush1.msra.mxu0 0.0
    %281 = vmatprep.subr.mxu0 0.0
    %282 = vmatpush1.msra.mxu0 0.0
    %283 = vmatprep.mubr.f32.mxu0 0.0
    %v284 = vand.u32 %v43, 4294901760
    %v285 = vsub.f32 %v43, %v284
    %286 = vmatmul.mubr.f32.gmra.mrb[0].mxu0 %v285
    %v287 = vpop.f32.mrb[0].mxu0
    %v288 = vadd.f32 %v210, %v287
    %v289 = vpop.f32.mrb[0].mxu0
    %290 = vdwg.mxu0
    %291 = vmatprep.subr.mxu0 0.0
    %v292 = vand.u32 %v38, 4294901760
    %293 = vmatpush1.msra.mxu0 %v292
    %294 = vmatprep.subr.mxu0 0.0
    %v295 = vand.u32 %v39, 4294901760
    %296 = vmatpush1.msra.mxu0 %v295
    %297 = vmatprep.subr.mxu0 0.0
    %v298 = vand.u32 %v47, 4294901760
    %299 = vmatpush1.msra.mxu0 %v298
    %300 = vmatprep.subr.mxu0 0.0
    %301 = vmatpush1.msra.mxu0 0.0
    %302 = vmatprep.subr.mxu0 0.0
    %303 = vmatpush1.msra.mxu0 0.0
    %304 = vmatprep.subr.mxu0 0.0
    %305 = vmatpush1.msra.mxu0 0.0
    %306 = vmatprep.subr.mxu0 0.0
    %307 = vmatpush1.msra.mxu0 0.0
    %308 = vmatprep.subr.mxu0 0.0
    %309 = vmatpush1.msra.mxu0 0.0
    %310 = vmatprep.subr.mxu0 0.0
    %311 = vmatpush1.msra.mxu0 0.0
    %312 = vmatprep.subr.mxu0 0.0
    %313 = vmatpush1.msra.mxu0 0.0
    %314 = vmatprep.subr.mxu0 0.0
    %315 = vmatpush1.msra.mxu0 0.0
    %316 = vmatprep.subr.mxu0 0.0
    %317 = vmatpush1.msra.mxu0 0.0
    %318 = vmatprep.subr.mxu0 0.0
    %319 = vmatpush1.msra.mxu0 0.0
    %320 = vmatprep.subr.mxu0 0.0
    %321 = vmatpush1.msra.mxu0 0.0
    %322 = vmatprep.subr.mxu0 0.0
    %323 = vmatpush1.msra.mxu0 0.0
    %324 = vmatprep.subr.mxu0 0.0
    %325 = vmatpush1.msra.mxu0 0.0
    %326 = vmatprep.subr.mxu0 0.0
    %327 = vmatpush1.msra.mxu0 0.0
    %328 = vmatprep.subr.mxu0 0.0
    %329 = vmatpush1.msra.mxu0 0.0
    %330 = vmatprep.subr.mxu0 0.0
    %331 = vmatpush1.msra.mxu0 0.0
    %332 = vmatprep.subr.mxu0 0.0
    %333 = vmatpush1.msra.mxu0 0.0
    %334 = vmatprep.subr.mxu0 0.0
    %335 = vmatpush1.msra.mxu0 0.0
    %336 = vmatprep.subr.mxu0 0.0
    %337 = vmatpush1.msra.mxu0 0.0
    %338 = vmatprep.subr.mxu0 0.0
    %339 = vmatpush1.msra.mxu0 0.0
    %340 = vmatprep.subr.mxu0 0.0
    %341 = vmatpush1.msra.mxu0 0.0
    %342 = vmatprep.subr.mxu0 0.0
    %343 = vmatpush1.msra.mxu0 0.0
    %344 = vmatprep.subr.mxu0 0.0
    %345 = vmatpush1.msra.mxu0 0.0
    %346 = vmatprep.subr.mxu0 0.0
    %347 = vmatpush1.msra.mxu0 0.0
    %348 = vmatprep.subr.mxu0 0.0
    %349 = vmatpush1.msra.mxu0 0.0
    %350 = vmatprep.subr.mxu0 0.0
    %351 = vmatpush1.msra.mxu0 0.0
    %352 = vmatprep.subr.mxu0 0.0
    %353 = vmatpush1.msra.mxu0 0.0
    %354 = vmatprep.subr.mxu0 0.0
    %355 = vmatpush1.msra.mxu0 0.0
    %356 = vmatprep.subr.mxu0 0.0
    %357 = vmatpush1.msra.mxu0 0.0
    %358 = vmatprep.mubr.f32.mxu0 0.0
    %v359 = vand.u32 %v43, 4294901760
    %v360 = vsub.f32 %v43, %v359
    %v361 = vand.u32 %v360, 4294901760
    %362 = vmatmul.mubr.f32.gmra.mrb[0].mxu0 %v361
    %v363 = vpop.f32.mrb[0].mxu0
    %v364 = vadd.f32 %v288, %v363
    %v365 = vpop.f32.mrb[0].mxu0
    %366 = vdwg.mxu0
    %367 = vmatprep.subr.mxu0 0.0
    %v368 = vand.u32 %v38, 4294901760
    %v369 = vsub.f32 %v38, %v368
    %v370 = vand.u32 %v369, 4294901760
    %371 = vmatpush1.msra.mxu0 %v370
    %372 = vmatprep.subr.mxu0 0.0
    %v373 = vand.u32 %v39, 4294901760
    %v374 = vsub.f32 %v39, %v373
    %v375 = vand.u32 %v374, 4294901760
    %376 = vmatpush1.msra.mxu0 %v375
    %377 = vmatprep.subr.mxu0 0.0
    %v378 = vand.u32 %v47, 4294901760
    %v379 = vsub.f32 %v47, %v378
    %v380 = vand.u32 %v379, 4294901760
    %381 = vmatpush1.msra.mxu0 %v380
    %382 = vmatprep.subr.mxu0 0.0
    %383 = vmatpush1.msra.mxu0 0.0
    %384 = vmatprep.subr.mxu0 0.0
    %385 = vmatpush1.msra.mxu0 0.0
    %386 = vmatprep.subr.mxu0 0.0
    %387 = vmatpush1.msra.mxu0 0.0
    %388 = vmatprep.subr.mxu0 0.0
    %389 = vmatpush1.msra.mxu0 0.0
    %390 = vmatprep.subr.mxu0 0.0
    %391 = vmatpush1.msra.mxu0 0.0
    %392 = vmatprep.subr.mxu0 0.0
    %393 = vmatpush1.msra.mxu0 0.0
    %394 = vmatprep.subr.mxu0 0.0
    %395 = vmatpush1.msra.mxu0 0.0
    %396 = vmatprep.subr.mxu0 0.0
    %397 = vmatpush1.msra.mxu0 0.0
    %398 = vmatprep.subr.mxu0 0.0
    %399 = vmatpush1.msra.mxu0 0.0
    %400 = vmatprep.subr.mxu0 0.0
    %401 = vmatpush1.msra.mxu0 0.0
    %402 = vmatprep.subr.mxu0 0.0
    %403 = vmatpush1.msra.mxu0 0.0
    %404 = vmatprep.subr.mxu0 0.0
    %405 = vmatpush1.msra.mxu0 0.0
    %406 = vmatprep.subr.mxu0 0.0
    %407 = vmatpush1.msra.mxu0 0.0
    %408 = vmatprep.subr.mxu0 0.0
    %409 = vmatpush1.msra.mxu0 0.0
    %410 = vmatprep.subr.mxu0 0.0
    %411 = vmatpush1.msra.mxu0 0.0
    %412 = vmatprep.subr.mxu0 0.0
    %413 = vmatpush1.msra.mxu0 0.0
    %414 = vmatprep.subr.mxu0 0.0
    %415 = vmatpush1.msra.mxu0 0.0
    %416 = vmatprep.subr.mxu0 0.0
    %417 = vmatpush1.msra.mxu0 0.0
    %418 = vmatprep.subr.mxu0 0.0
    %419 = vmatpush1.msra.mxu0 0.0
    %420 = vmatprep.subr.mxu0 0.0
    %421 = vmatpush1.msra.mxu0 0.0
    %422 = vmatprep.subr.mxu0 0.0
    %423 = vmatpush1.msra.mxu0 0.0
    %424 = vmatprep.subr.mxu0 0.0
    %425 = vmatpush1.msra.mxu0 0.0
    %426 = vmatprep.subr.mxu0 0.0
    %427 = vmatpush1.msra.mxu0 0.0
    %428 = vmatprep.subr.mxu0 0.0
    %429 = vmatpush1.msra.mxu0 0.0
    %430 = vmatprep.subr.mxu0 0.0
    %431 = vmatpush1.msra.mxu0 0.0
    %432 = vmatprep.subr.mxu0 0.0
    %433 = vmatpush1.msra.mxu0 0.0
    %434 = vmatprep.subr.mxu0 0.0
    %435 = vmatpush1.msra.mxu0 0.0
    %436 = vmatprep.subr.mxu0 0.0
    %437 = vmatpush1.msra.mxu0 0.0
    %438 = vmatprep.subr.mxu0 0.0
    %439 = vmatpush1.msra.mxu0 0.0
    %440 = vmatprep.mubr.f32.mxu0 0.0
    %v441 = vand.u32 %v43, 4294901760
    %442 = vmatmul.mubr.f32.gmra.mrb[0].mxu0 %v441
    %v443 = vpop.f32.mrb[0].mxu0
    %v444 = vadd.f32 %v364, %v443
    %v445 = vpop.f32.mrb[0].mxu0
    %446 = vdwg.mxu0
    %447 = vmatprep.subr.mxu0 0.0
    %v448 = vand.u32 %v38, 4294901760
    %449 = vmatpush1.msra.mxu0 %v448
    %450 = vmatprep.subr.mxu0 0.0
    %v451 = vand.u32 %v39, 4294901760
    %452 = vmatpush1.msra.mxu0 %v451
    %453 = vmatprep.subr.mxu0 0.0
    %v454 = vand.u32 %v47, 4294901760
    %455 = vmatpush1.msra.mxu0 %v454
    %456 = vmatprep.subr.mxu0 0.0
    %457 = vmatpush1.msra.mxu0 0.0
    %458 = vmatprep.subr.mxu0 0.0
    %459 = vmatpush1.msra.mxu0 0.0
    %460 = vmatprep.subr.mxu0 0.0
    %461 = vmatpush1.msra.mxu0 0.0
    %462 = vmatprep.subr.mxu0 0.0
    %463 = vmatpush1.msra.mxu0 0.0
    %464 = vmatprep.subr.mxu0 0.0
    %465 = vmatpush1.msra.mxu0 0.0
    %466 = vmatprep.subr.mxu0 0.0
    %467 = vmatpush1.msra.mxu0 0.0
    %468 = vmatprep.subr.mxu0 0.0
    %469 = vmatpush1.msra.mxu0 0.0
    %470 = vmatprep.subr.mxu0 0.0
    %471 = vmatpush1.msra.mxu0 0.0
    %472 = vmatprep.subr.mxu0 0.0
    %473 = vmatpush1.msra.mxu0 0.0
    %474 = vmatprep.subr.mxu0 0.0
    %475 = vmatpush1.msra.mxu0 0.0
    %476 = vmatprep.subr.mxu0 0.0
    %477 = vmatpush1.msra.mxu0 0.0
    %478 = vmatprep.subr.mxu0 0.0
    %479 = vmatpush1.msra.mxu0 0.0
    %480 = vmatprep.subr.mxu0 0.0
    %481 = vmatpush1.msra.mxu0 0.0
    %482 = vmatprep.subr.mxu0 0.0
    %483 = vmatpush1.msra.mxu0 0.0
    %484 = vmatprep.subr.mxu0 0.0
    %485 = vmatpush1.msra.mxu0 0.0
    %486 = vmatprep.subr.mxu0 0.0
    %487 = vmatpush1.msra.mxu0 0.0
    %488 = vmatprep.subr.mxu0 0.0
    %489 = vmatpush1.msra.mxu0 0.0
    %490 = vmatprep.subr.mxu0 0.0
    %491 = vmatpush1.msra.mxu0 0.0
    %492 = vmatprep.subr.mxu0 0.0
    %493 = vmatpush1.msra.mxu0 0.0
    %494 = vmatprep.subr.mxu0 0.0
    %495 = vmatpush1.msra.mxu0 0.0
    %496 = vmatprep.subr.mxu0 0.0
    %497 = vmatpush1.msra.mxu0 0.0
    %498 = vmatprep.subr.mxu0 0.0
    %499 = vmatpush1.msra.mxu0 0.0
    %500 = vmatprep.subr.mxu0 0.0
    %501 = vmatpush1.msra.mxu0 0.0
    %502 = vmatprep.subr.mxu0 0.0
    %503 = vmatpush1.msra.mxu0 0.0
    %504 = vmatprep.subr.mxu0 0.0
    %505 = vmatpush1.msra.mxu0 0.0
    %506 = vmatprep.subr.mxu0 0.0
    %507 = vmatpush1.msra.mxu0 0.0
    %508 = vmatprep.subr.mxu0 0.0
    %509 = vmatpush1.msra.mxu0 0.0
    %510 = vmatprep.subr.mxu0 0.0
    %511 = vmatpush1.msra.mxu0 0.0
    %512 = vmatprep.subr.mxu0 0.0
    %513 = vmatpush1.msra.mxu0 0.0
    %514 = vmatprep.mubr.f32.mxu0 0.0
    %v515 = vand.u32 %v43, 4294901760
    %516 = vmatmul.mubr.f32.gmra.mrb[0].mxu0 %v515
    %v517 = vpop.f32.mrb[0].mxu0
    %v518 = vadd.f32 %v444, %v517
    %v519 = vpop.f32.mrb[0].mxu0
    %520 = vdwg.mxu0
    %v521 = vld [vmem:[%s0] sm:$0xff]
    %vm522 = vcmask 130048
    %523 = vst.msk [vmem:[#allocation5] sm:$0xff] %vm522, %v521
    %525 = vrot.lane.b32.xlu0 %v518, 16
    %v526 = vpop.permute.xlu0 %525
    %vm528 = vcmask 392320
    %529 = vst.msk [vmem:[#allocation5] sm:$0xff] %vm528, %v526
    // Predicated region
    $region18: #{tpu_custom_call.1} parent=1 // pred_check
      _
    $region19: #{tpu_custom_call.1} parent=1 // pred_check_branch
      %531 = sbr.rel (0) target = $region21
    $region20: #{tpu_custom_call.1} parent=1 // pred_region
      %s533 = ssub.s32 128, 128
      %534 = vsyncadd [#allocation4], %s533
      %s536 = sshll.u32 [#allocation5], 4
      %s537 = int_to_ptr.vmem [resolvable:$true] %s536
      %539 = dma.vmem_to_hbm [thread:$0]  %s537, 128, %s3, [#allocation4]
    $region21: #{tpu_custom_call.1} parent=1 // pred_fallthru
      _
    // Predicated region
    $region22: #{tpu_custom_call.1} parent=1 // pred_check
      _
    $region23: #{tpu_custom_call.1} parent=1 // pred_check_branch
      %541 = sbr.rel (0) target = $region25
    $region24: #{tpu_custom_call.1} parent=1 // pred_region
      %542 = dma.done [#allocation4], 128
    $region25: #{tpu_custom_call.1} parent=1 // pred_fallthru
      _
    %543 = vsyncpa [#allocation3], 1
    %544 = vsyncpa [#allocation4], 1

</llo_original>
